<compile_context>
chip_gen: v5e
topology: v5e:2x2
jax: 0.10.0
libtpu: 0.0.40
codegen_flags: <defaults>
</compile_context>

<pallas_src>
import functools

import jax
import jax.numpy as jnp
from jax.experimental import pallas as pl
from jax.experimental.pallas import tpu as pltpu

IN_FEATURES = 28 * 28   # 784
HIDDEN = 100
HIDDEN_PAD = 128        # zero-padded hidden width (vreg / MXU friendly)
OUT = 10
OUT_PAD = 128           # lane-dense output slab width
MAX_TILE_M = 2048       # max rows of x per grid step (multiple of 8)


def _round_up(x, m):
    return (x + m - 1) // m * m


def _choose_tile(n, tile_m):
    """Pick the batch tile size.

    - Large batches: big tiles (amortize the ~0.35 us per-step overhead) but
      keep >= ~4 grid steps so v7x megacore has work on both TensorCores.
    - If a single tile covers the whole batch, use block rows == n (block equal
      to the full array dim is always a legal BlockSpec, no ragged edge).
    """
    tm = min(tile_m, max(512, _round_up(pl.cdiv(n, 4), 8)))
    if tm >= n:
        return n
    return tm  # multiple of 8; last block may be ragged (masked on write)


def _mlp_kernel(x_ref, w1_ref, b1_ref, w2_ref, b2_ref, o_ref):
    # x_ref:  (TM, 784) f32      w1_ref: (784, 128) bf16   b1_ref: (1, 128) f32
    # w2_ref: (128, 128) bf16    b2_ref: (1, 128) f32      o_ref:  (TM, 128) f32
    x = x_ref[...].astype(jnp.bfloat16)                       # bf16 MXU operands
    h = jnp.dot(x, w1_ref[...], preferred_element_type=jnp.float32) + b1_ref[...]
    h = jnp.maximum(h, 0.0).astype(jnp.bfloat16)               # ReLU, bf16 for 2nd matmul
    logits = jnp.dot(h, w2_ref[...], preferred_element_type=jnp.float32) + b2_ref[...]
    o_ref[...] = logits.astype(o_ref.dtype)                    # lane-dense 128-wide store


def prepare_params(w1, b1, w2, b2):
    """One-time prep: zero-pad to vreg-friendly widths and cast weights to bf16.

    Hoisted out of the forward path so padding/cast never runs per call.
    Padding is zeros, so the math is unchanged.
    """
    w1p = jnp.pad(w1, ((0, 0), (0, HIDDEN_PAD - HIDDEN))).astype(jnp.bfloat16)
    b1p = jnp.pad(b1.reshape(1, HIDDEN), ((0, 0), (0, HIDDEN_PAD - HIDDEN))).astype(jnp.float32)
    w2p = jnp.pad(w2, ((0, HIDDEN_PAD - HIDDEN), (0, OUT_PAD - OUT))).astype(jnp.bfloat16)
    b2p = jnp.pad(b2.reshape(1, OUT), ((0, 0), (0, OUT_PAD - OUT))).astype(jnp.float32)
    return w1p, b1p, w2p, b2p


@functools.partial(jax.jit, static_argnames=("tile_m",))
def rubin_nn_forward(x_nchw, w1p, b1p, w2p, b2p, *, tile_m=MAX_TILE_M):
    """x_nchw: (N, 1, 28, 28) float32 -> logits (N, 10) float32.

    Takes *prepared* (padded, bf16) params from prepare_params().
    """
    n = x_nchw.shape[0]
    x_flat = x_nchw.reshape(n, IN_FEATURES)   # nn.Flatten semantics (row-major)

    tm = _choose_tile(n, tile_m)
    grid = (pl.cdiv(n, tm),)                  # ragged last block handled by Pallas

    out = pl.pallas_call(
        _mlp_kernel,
        out_shape=jax.ShapeDtypeStruct((n, OUT_PAD), jnp.float32),
        grid=grid,
        in_specs=[
            # x: tiled over the batch -> double-buffered DMA per grid step
            pl.BlockSpec((tm, IN_FEATURES), lambda i: (i, 0)),
            # weights/biases: constant block -> VMEM-resident, single buffer
            pl.BlockSpec((IN_FEATURES, HIDDEN_PAD), lambda i: (0, 0),
                         pipeline_mode=pl.Buffered(1)),
            pl.BlockSpec((1, HIDDEN_PAD), lambda i: (0, 0),
                         pipeline_mode=pl.Buffered(1)),
            pl.BlockSpec((HIDDEN_PAD, OUT_PAD), lambda i: (0, 0),
                         pipeline_mode=pl.Buffered(1)),
            pl.BlockSpec((1, OUT_PAD), lambda i: (0, 0),
                         pipeline_mode=pl.Buffered(1)),
        ],
        out_specs=pl.BlockSpec((tm, OUT_PAD), lambda i: (i, 0)),
        compiler_params=pltpu.CompilerParams(
            # batch axis is independent -> shard grid steps across TCs on v7x
            dimension_semantics=("parallel",),
            # explicit VMEM budget: headroom for tm sweeps, safe on v7x (64 MiB)
            vmem_limit_bytes=48 * 1024 * 1024,
        ),
    )(x_flat, w1p, b1p, w2p, b2p)

    # Slice fuses under jit (no standalone eager copy). Rows are already n.
    return out[:, :OUT]


def init_params(key):
    """Deterministic init mirroring nn.Linear default (U(-1/sqrt(fan_in), +))."""
    k1, k2, k3, k4 = jax.random.split(key, 4)
    fan1 = IN_FEATURES
    fan2 = HIDDEN
    bound1 = 1.0 / jnp.sqrt(fan1)
    bound2 = 1.0 / jnp.sqrt(fan2)
    # stored as (in_features, out_features)
    w1 = jax.random.uniform(k1, (fan1, HIDDEN), jnp.float32, -bound1, bound1)
    b1 = jax.random.uniform(k2, (HIDDEN,), jnp.float32, -bound1, bound1)
    w2 = jax.random.uniform(k3, (fan2, OUT), jnp.float32, -bound2, bound2)
    b2 = jax.random.uniform(k4, (OUT,), jnp.float32, -bound2, bound2)
    return w1, b1, w2, b2


def _reference_f32(x_nchw, w1, b1, w2, b2):
    x_flat = x_nchw.reshape(x_nchw.shape[0], -1)
    return jnp.maximum(x_flat @ w1 + b1, 0.0) @ w2 + b2


def _reference_bf16(x_nchw, w1, b1, w2, b2):
    """Mirrors the kernel's bf16-operand / f32-accumulate arithmetic."""
    x = x_nchw.reshape(x_nchw.shape[0], -1).astype(jnp.bfloat16)
    h = jnp.dot(x, w1.astype(jnp.bfloat16),
                preferred_element_type=jnp.float32) + b1
    h = jnp.maximum(h, 0.0).astype(jnp.bfloat16)
    return jnp.dot(h, w2.astype(jnp.bfloat16),
                   preferred_element_type=jnp.float32) + b2


if __name__ == "__main__":
    key = jax.random.PRNGKey(0)
    k_x, k_x2, k_p = jax.random.split(key, 3)
    w1, b1, w2, b2 = init_params(k_p)
    params = prepare_params(w1, b1, w2, b2)   # one-time pad + bf16 cast

    # small batch, MNIST-shaped NCHW input (28x28 fixed by the architecture)
    x = jax.random.normal(k_x, (2, 1, 28, 28), jnp.float32)
    logits = rubin_nn_forward(x, *params)
    jax.block_until_ready(logits)
    assert logits.shape == (2, OUT)
    assert jnp.allclose(logits, _reference_bf16(x, w1, b1, w2, b2),
                        atol=2e-3, rtol=2e-3)
    assert jnp.allclose(logits, _reference_f32(x, w1, b1, w2, b2),
                        atol=3e-2, rtol=3e-2)

    # larger batch exercises the multi-tile grid + ragged-last-block path
    x_big = jax.random.normal(k_x2, (600, 1, 28, 28), jnp.float32)
    logits_big = rubin_nn_forward(x_big, *params)
    jax.block_until_ready(logits_big)
    assert logits_big.shape == (600, OUT)
    assert jnp.allclose(logits_big, _reference_bf16(x_big, w1, b1, w2, b2),
                        atol=2e-3, rtol=2e-3)
    assert jnp.allclose(logits_big, _reference_f32(x_big, w1, b1, w2, b2),
                        atol=3e-2, rtol=3e-2)

    print("KERNEL_OK")
</pallas_src>

<mosaic_0001>
module attributes {stable_mosaic.version = 11 : i64} {
  func.func @_mlp_kernel(%arg0: i32, %arg1: memref<2x784xf32, #tpu.memory_space<vmem>>, %arg2: memref<784x128xbf16, #tpu.memory_space<vmem>>, %arg3: memref<1x128xf32, #tpu.memory_space<vmem>>, %arg4: memref<128x128xbf16, #tpu.memory_space<vmem>>, %arg5: memref<1x128xf32, #tpu.memory_space<vmem>>, %arg6: memref<2x128xf32, #tpu.memory_space<vmem>>) attributes {dimension_semantics = [#tpu.dimension_semantics<parallel>], iteration_bounds = array<i64: 1>, scalar_prefetch = 0 : i64, scratch_operands = 0 : i64, tpu.core_type = #tpu.core_type<tc>, window_params = [{transform_indices = @transform_0, window_bounds = array<i64: 2, 784>}, {pipeline_mode = #tpu.pipeline_mode<synchronous>, transform_indices = @transform_1, window_bounds = array<i64: 784, 128>}, {pipeline_mode = #tpu.pipeline_mode<synchronous>, transform_indices = @transform_2, window_bounds = array<i64: 1, 128>}, {pipeline_mode = #tpu.pipeline_mode<synchronous>, transform_indices = @transform_3, window_bounds = array<i64: 128, 128>}, {pipeline_mode = #tpu.pipeline_mode<synchronous>, transform_indices = @transform_4, window_bounds = array<i64: 1, 128>}, {transform_indices = @transform_5, window_bounds = array<i64: 2, 128>}]} {
    %c0 = arith.constant 0 : index
    %c0_0 = arith.constant 0 : index
    %0 = vector.load %arg1[%c0, %c0_0] : memref<2x784xf32, #tpu.memory_space<vmem>>, vector<2x784xf32>
    %1 = arith.truncf %0 : vector<2x784xf32> to vector<2x784xbf16>
    %c0_1 = arith.constant 0 : index
    %c0_2 = arith.constant 0 : index
    %2 = vector.load %arg2[%c0_1, %c0_2] : memref<784x128xbf16, #tpu.memory_space<vmem>>, vector<784x128xbf16>
    %cst = arith.constant dense<0.000000e+00> : vector<2x128xf32>
    %3 = tpu.matmul %1, %2, %cst {dimension_numbers = #tpu.dot_dimension_numbers<[1], [0], [0], [1], [0, 0, 1, 1], [], []>} : vector<2x784xbf16>, vector<784x128xbf16>, vector<2x128xf32> -> vector<2x128xf32>
    %c0_3 = arith.constant 0 : index
    %c0_4 = arith.constant 0 : index
    %4 = vector.load %arg3[%c0_3, %c0_4] : memref<1x128xf32, #tpu.memory_space<vmem>>, vector<1x128xf32>
    %5 = vector.broadcast %4 : vector<1x128xf32> to vector<2x128xf32>
    %6 = arith.addf %3, %5 : vector<2x128xf32>
    %cst_5 = arith.constant 0.000000e+00 : f32
    %7 = vector.broadcast %cst_5 : f32 to vector<2x128xf32>
    %8 = arith.maximumf %6, %7 : vector<2x128xf32>
    %9 = arith.truncf %8 : vector<2x128xf32> to vector<2x128xbf16>
    %c0_6 = arith.constant 0 : index
    %c0_7 = arith.constant 0 : index
    %10 = vector.load %arg4[%c0_6, %c0_7] : memref<128x128xbf16, #tpu.memory_space<vmem>>, vector<128x128xbf16>
    %cst_8 = arith.constant dense<0.000000e+00> : vector<2x128xf32>
    %11 = tpu.matmul %9, %10, %cst_8 {dimension_numbers = #tpu.dot_dimension_numbers<[1], [0], [0], [1], [0, 0, 1, 1], [], []>} : vector<2x128xbf16>, vector<128x128xbf16>, vector<2x128xf32> -> vector<2x128xf32>
    %c0_9 = arith.constant 0 : index
    %c0_10 = arith.constant 0 : index
    %12 = vector.load %arg5[%c0_9, %c0_10] : memref<1x128xf32, #tpu.memory_space<vmem>>, vector<1x128xf32>
    %13 = vector.broadcast %12 : vector<1x128xf32> to vector<2x128xf32>
    %14 = arith.addf %11, %13 : vector<2x128xf32>
    %c0_11 = arith.constant 0 : index
    %c0_12 = arith.constant 0 : index
    %15 = vector.load %arg6[%c0_11, %c0_12] : memref<2x128xf32, #tpu.memory_space<vmem>>, vector<2x128xf32>
    tpu.vector_store %arg6[%c0_11, %c0_12], %14 {strides = array<i32>} : memref<2x128xf32, #tpu.memory_space<vmem>>, vector<2x128xf32>,
    return
  }
  func.func @transform_0(%arg0: i32) -> (i32, i32) {
    %c0_i32 = arith.constant 0 : i32
    %c0_i32_0 = arith.constant 0 : i32
    return %arg0, %c0_i32 : i32, i32
  }
  func.func @transform_1(%arg0: i32) -> (i32, i32) {
    %c0_i32 = arith.constant 0 : i32
    %c0_i32_0 = arith.constant 0 : i32
    %c0_i32_1 = arith.constant 0 : i32
    return %c0_i32, %c0_i32_0 : i32, i32
  }
  func.func @transform_2(%arg0: i32) -> (i32, i32) {
    %c0_i32 = arith.constant 0 : i32
    %c0_i32_0 = arith.constant 0 : i32
    %c0_i32_1 = arith.constant 0 : i32
    return %c0_i32, %c0_i32_0 : i32, i32
  }
  func.func @transform_3(%arg0: i32) -> (i32, i32) {
    %c0_i32 = arith.constant 0 : i32
    %c0_i32_0 = arith.constant 0 : i32
    %c0_i32_1 = arith.constant 0 : i32
    return %c0_i32, %c0_i32_0 : i32, i32
  }
  func.func @transform_4(%arg0: i32) -> (i32, i32) {
    %c0_i32 = arith.constant 0 : i32
    %c0_i32_0 = arith.constant 0 : i32
    %c0_i32_1 = arith.constant 0 : i32
    return %c0_i32, %c0_i32_0 : i32, i32
  }
  func.func @transform_5(%arg0: i32) -> (i32, i32) {
    %c0_i32 = arith.constant 0 : i32
    %c0_i32_0 = arith.constant 0 : i32
    return %arg0, %c0_i32 : i32, i32
  }
}

</mosaic_0001>

<llo_original>
// kernel: rubin_nn_forward.1
$region0: #{rubin_nn_forward.1}
  #allocation0 [shape = 'u32[]', space=smem, size = 0x4, offset = 0x4, fixed_abs, tag = 'smem constant byte address 0x4 - core index']
  #allocation1 [shape = 'u32[72,128]{1,0:T(1,128)}', space=vmem, size = 0x9000, scoped, tag = 'internal scratch']
  %s0 = inlined_call_operand.vmem [shape: f32[2,784], index: 0, kind: input, shape index: {}]
  %s1 = inlined_call_operand.hbm [shape: bf16[784,128], index: 1, kind: input, shape index: {}]
  %s2 = inlined_call_operand.vmem [shape: f32[1,128], index: 2, kind: input, shape index: {}]
  %s3 = inlined_call_operand.vmem [shape: bf16[128,128], index: 3, kind: input, shape index: {}]
  %s4 = inlined_call_operand.vmem [shape: f32[1,128], index: 4, kind: input, shape index: {}]
  %s5 = inlined_call_operand.hbm [shape: f32[2,128], index: 5, kind: output, shape index: {}]
  %s6 = sld [smem:[#allocation0]]
  $region34: #{rubin_nn_forward.1} parent=0
    _
  %s8 = ssub.s32 1, %s6
  %s9 = scalar_select 0, %s8, %s6
  $region1: #{rubin_nn_forward.1} parent=0
    #allocation2 [shape = 'u8[200704]{0}', space=vmem, size = 0x31000, scoped, tag = 'input window, operand 1, single buffered']
    #allocation3 [shape = 's32[1]{0}', space=sflag, size = 0x4, scoped, tag = 'scoped memory for rubin_nn_forward.1']
    #allocation4 [shape = 's32[1]{0}', space=sflag, size = 0x4, scoped, tag = 'scoped memory for rubin_nn_forward.1']
    #allocation5 [shape = 'u8[1024]{0}', space=vmem, size = 0x400, scoped, tag = 'output window, operand 0, single buffered']
    %10 = vsyncpa [#allocation3], 0
    %11 = vsyncpa [#allocation4], 0
    // Predicated region
    $region2: #{rubin_nn_forward.1} parent=1 // pred_check
      _
    $region3: #{rubin_nn_forward.1} parent=1 // pred_check_branch
      %13 = sbr.rel (0) target = $region5
    $region4: #{rubin_nn_forward.1} parent=1 // pred_region
      _
    $region5: #{rubin_nn_forward.1} parent=1 // pred_fallthru
      _
    // Predicated region
    $region6: #{rubin_nn_forward.1} parent=1 // pred_check
      _
    $region7: #{rubin_nn_forward.1} parent=1 // pred_check_branch
      %15 = sbr.rel (0) target = $region9
    $region8: #{rubin_nn_forward.1} parent=1 // pred_region
      %17 = vsyncadd [#allocation3], 0
      %s18 = sshll.u32 %s1, 4
      %s19 = int_to_ptr.hbm [resolvable:$true] %s18
      %s20 = sshll.u32 [#allocation2], 4
      %s21 = int_to_ptr.vmem [resolvable:$true] %s20
      %26 = dma.hbm_to_vmem [thread:$0]  %s19, 6272, %s21, [#allocation3], 64, 64, 4
    $region9: #{rubin_nn_forward.1} parent=1 // pred_fallthru
      _
    // Predicated region
    $region10: #{rubin_nn_forward.1} parent=1 // pred_check
      _
    $region11: #{rubin_nn_forward.1} parent=1 // pred_check_branch
      %28 = sbr.rel (0) target = $region13
    $region12: #{rubin_nn_forward.1} parent=1 // pred_region
      _
    $region13: #{rubin_nn_forward.1} parent=1 // pred_fallthru
      _
    // Predicated region
    $region14: #{rubin_nn_forward.1} parent=1 // pred_check
      _
    $region15: #{rubin_nn_forward.1} parent=1 // pred_check_branch
      %30 = sbr.rel (0) target = $region17
    $region16: #{rubin_nn_forward.1} parent=1 // pred_region
      _
    $region17: #{rubin_nn_forward.1} parent=1 // pred_fallthru
      _
    // Predicated region
    $region18: #{rubin_nn_forward.1} parent=1 // pred_check
      _
    $region19: #{rubin_nn_forward.1} parent=1 // pred_check_branch
      %32 = sbr.rel (0) target = $region21
    $region20: #{rubin_nn_forward.1} parent=1 // pred_region
      _
    $region21: #{rubin_nn_forward.1} parent=1 // pred_fallthru
      _
    // Predicated region
    $region22: #{rubin_nn_forward.1} parent=1 // pred_check
      _
    $region23: #{rubin_nn_forward.1} parent=1 // pred_check_branch
      %34 = sbr.rel (0) target = $region25
    $region24: #{rubin_nn_forward.1} parent=1 // pred_region
      %36 = dma.done [#allocation3], 6272
    $region25: #{rubin_nn_forward.1} parent=1 // pred_fallthru
      _
    %v38 = vld [vmem:[%s0] sm:$0xff]
    %v39 = vld [vmem:[%s0 + $0x8] sm:$0x3f]
    %42 = vst [vmem:[#allocation1] ss:$4 sm:$0xff] %v38
    %s43 = scalar_lea.vmem [#allocation1], 32
    %44 = vst [vmem:[%s43] ss:$4 sm:$0xff] %v39
    %v45 = vld.sshfl [vmem:[#allocation1] sm:$0xff pattern:$0x73625140]
    %v46 = vld.sshfl [vmem:[#allocation1 + $0x8] sm:$0xff pattern:$0x73625140]
    %v47 = vld.sshfl [vmem:[#allocation1 + $0x10] sm:$0xff pattern:$0x73625140]
    %v48 = vld.sshfl [vmem:[#allocation1 + $0x18] sm:$0xff pattern:$0x73625140]
    %v49 = vld.sshfl [vmem:[#allocation1 + $0x20] sm:$0xff pattern:$0x73625140]
    %v50 = vld.sshfl [vmem:[#allocation1 + $0x28] sm:$0xff pattern:$0x73625140]
    %v51 = vld.sshfl [vmem:[#allocation1 + $0x30] sm:$0xff pattern:$0x73625140]
    %v59 = vpack.c.bf16 %v45, %v45
    %v60 = vpack.c.bf16 %v46, %v46
    %v61 = vpack.c.bf16 %v47, %v47
    %v62 = vpack.c.bf16 %v48, %v48
    %v63 = vpack.c.bf16 %v49, %v49
    %v64 = vpack.c.bf16 %v50, %v50
    %v65 = vpack.c.bf16 %v51, %v51
    %v66 = vld [vmem:[#allocation2] sm:$0xf]
    %v67 = vld [vmem:[#allocation2 + $0x4] sm:$0xf]
    %v68 = vld [vmem:[#allocation2 + $0x8] sm:$0xf]
    %v69 = vld [vmem:[#allocation2 + $0xc] sm:$0xf]
    %v70 = vld [vmem:[#allocation2 + $0x10] sm:$0xf]
    %v71 = vld [vmem:[#allocation2 + $0x14] sm:$0xf]
    %v72 = vld [vmem:[#allocation2 + $0x18] sm:$0xf]
    %v73 = vld [vmem:[#allocation2 + $0x1c] sm:$0xf]
    %v74 = vld [vmem:[#allocation2 + $0x20] sm:$0xf]
    %v75 = vld [vmem:[#allocation2 + $0x24] sm:$0xf]
    %v76 = vld [vmem:[#allocation2 + $0x28] sm:$0xf]
    %v77 = vld [vmem:[#allocation2 + $0x2c] sm:$0xf]
    %v78 = vld [vmem:[#allocation2 + $0x30] sm:$0xf]
    %v79 = vld [vmem:[#allocation2 + $0x34] sm:$0xf]
    %v80 = vld [vmem:[#allocation2 + $0x38] sm:$0xf]
    %v81 = vld [vmem:[#allocation2 + $0x3c] sm:$0xf]
    %v82 = vld [vmem:[#allocation2 + $0x40] sm:$0xf]
    %v83 = vld [vmem:[#allocation2 + $0x44] sm:$0xf]
    %v84 = vld [vmem:[#allocation2 + $0x48] sm:$0xf]
    %v85 = vld [vmem:[#allocation2 + $0x4c] sm:$0xf]
    %v86 = vld [vmem:[#allocation2 + $0x50] sm:$0xf]
    %v87 = vld [vmem:[#allocation2 + $0x54] sm:$0xf]
    %v88 = vld [vmem:[#allocation2 + $0x58] sm:$0xf]
    %v89 = vld [vmem:[#allocation2 + $0x5c] sm:$0xf]
    %v90 = vld [vmem:[#allocation2 + $0x60] sm:$0xf]
    %v91 = vld [vmem:[#allocation2 + $0x64] sm:$0xf]
    %v92 = vld [vmem:[#allocation2 + $0x68] sm:$0xf]
    %v93 = vld [vmem:[#allocation2 + $0x6c] sm:$0xf]
    %v94 = vld [vmem:[#allocation2 + $0x70] sm:$0xf]
    %v95 = vld [vmem:[#allocation2 + $0x74] sm:$0xf]
    %v96 = vld [vmem:[#allocation2 + $0x78] sm:$0xf]
    %v97 = vld [vmem:[#allocation2 + $0x7c] sm:$0xf]
    %v98 = vld [vmem:[#allocation2 + $0x80] sm:$0xf]
    %v99 = vld [vmem:[#allocation2 + $0x84] sm:$0xf]
    %v100 = vld [vmem:[#allocation2 + $0x88] sm:$0xf]
    %v101 = vld [vmem:[#allocation2 + $0x8c] sm:$0xf]
    %v102 = vld [vmem:[#allocation2 + $0x90] sm:$0xf]
    %v103 = vld [vmem:[#allocation2 + $0x94] sm:$0xf]
    %v104 = vld [vmem:[#allocation2 + $0x98] sm:$0xf]
    %v105 = vld [vmem:[#allocation2 + $0x9c] sm:$0xf]
    %v106 = vld [vmem:[#allocation2 + $0xa0] sm:$0xf]
    %v107 = vld [vmem:[#allocation2 + $0xa4] sm:$0xf]
    %v108 = vld [vmem:[#allocation2 + $0xa8] sm:$0xf]
    %v109 = vld [vmem:[#allocation2 + $0xac] sm:$0xf]
    %v110 = vld [vmem:[#allocation2 + $0xb0] sm:$0xf]
    %v111 = vld [vmem:[#allocation2 + $0xb4] sm:$0xf]
    %v112 = vld [vmem:[#allocation2 + $0xb8] sm:$0xf]
    %v113 = vld [vmem:[#allocation2 + $0xbc] sm:$0xf]
    %v114 = vld [vmem:[#allocation2 + $0xc0] sm:$0xf]
    %v115 = vld [vmem:[#allocation2 + $0xc4] sm:$0xf]
    %v116 = vld [vmem:[#allocation2 + $0xc8] sm:$0xf]
    %v117 = vld [vmem:[#allocation2 + $0xcc] sm:$0xf]
    %v118 = vld [vmem:[#allocation2 + $0xd0] sm:$0xf]
    %v119 = vld [vmem:[#allocation2 + $0xd4] sm:$0xf]
    %v120 = vld [vmem:[#allocation2 + $0xd8] sm:$0xf]
    %v121 = vld [vmem:[#allocation2 + $0xdc] sm:$0xf]
    %v122 = vld [vmem:[#allocation2 + $0xe0] sm:$0xf]
    %v123 = vld [vmem:[#allocation2 + $0xe4] sm:$0xf]
    %v124 = vld [vmem:[#allocation2 + $0xe8] sm:$0xf]
    %v125 = vld [vmem:[#allocation2 + $0xec] sm:$0xf]
    %v126 = vld [vmem:[#allocation2 + $0xf0] sm:$0xf]
    %v127 = vld [vmem:[#allocation2 + $0xf4] sm:$0xf]
    %v128 = vld [vmem:[#allocation2 + $0xf8] sm:$0xf]
    %v129 = vld [vmem:[#allocation2 + $0xfc] sm:$0xf]
    %v130 = vld [vmem:[#allocation2 + $0x100] sm:$0xf]
    %v131 = vld [vmem:[#allocation2 + $0x104] sm:$0xf]
    %v132 = vld [vmem:[#allocation2 + $0x108] sm:$0xf]
    %v133 = vld [vmem:[#allocation2 + $0x10c] sm:$0xf]
    %v134 = vld [vmem:[#allocation2 + $0x110] sm:$0xf]
    %v135 = vld [vmem:[#allocation2 + $0x114] sm:$0xf]
    %v136 = vld [vmem:[#allocation2 + $0x118] sm:$0xf]
    %v137 = vld [vmem:[#allocation2 + $0x11c] sm:$0xf]
    %v138 = vld [vmem:[#allocation2 + $0x120] sm:$0xf]
    %v139 = vld [vmem:[#allocation2 + $0x124] sm:$0xf]
    %v140 = vld [vmem:[#allocation2 + $0x128] sm:$0xf]
    %v141 = vld [vmem:[#allocation2 + $0x12c] sm:$0xf]
    %v142 = vld [vmem:[#allocation2 + $0x130] sm:$0xf]
    %v143 = vld [vmem:[#allocation2 + $0x134] sm:$0xf]
    %v144 = vld [vmem:[#allocation2 + $0x138] sm:$0xf]
    %v145 = vld [vmem:[#allocation2 + $0x13c] sm:$0xf]
    %v146 = vld [vmem:[#allocation2 + $0x140] sm:$0xf]
    %v147 = vld [vmem:[#allocation2 + $0x144] sm:$0xf]
    %v148 = vld [vmem:[#allocation2 + $0x148] sm:$0xf]
    %v149 = vld [vmem:[#allocation2 + $0x14c] sm:$0xf]
    %v150 = vld [vmem:[#allocation2 + $0x150] sm:$0xf]
    %v151 = vld [vmem:[#allocation2 + $0x154] sm:$0xf]
    %v152 = vld [vmem:[#allocation2 + $0x158] sm:$0xf]
    %v153 = vld [vmem:[#allocation2 + $0x15c] sm:$0xf]
    %v154 = vld [vmem:[#allocation2 + $0x160] sm:$0xf]
    %v155 = vld [vmem:[#allocation2 + $0x164] sm:$0xf]
    %v156 = vld [vmem:[#allocation2 + $0x168] sm:$0xf]
    %v157 = vld [vmem:[#allocation2 + $0x16c] sm:$0xf]
    %v158 = vld [vmem:[#allocation2 + $0x170] sm:$0xf]
    %v159 = vld [vmem:[#allocation2 + $0x174] sm:$0xf]
    %v160 = vld [vmem:[#allocation2 + $0x178] sm:$0xf]
    %v161 = vld [vmem:[#allocation2 + $0x17c] sm:$0xf]
    %v162 = vld [vmem:[#allocation2 + $0x180] sm:$0xf]
    %v163 = vld [vmem:[#allocation2 + $0x184] sm:$0xf]
    %v164 = vld [vmem:[%s2] sm:$0x1]
    %v166 = vperm.slane %v164, 0
    %v266 = vunpack.c.l.b16 %v66
    %v267 = vunpack.c.l.b16 %v67
    %v268 = vunpack.c.l.b16 %v68
    %v269 = vunpack.c.l.b16 %v69
    %v270 = vunpack.c.l.b16 %v70
    %v271 = vunpack.c.l.b16 %v71
    %v272 = vunpack.c.l.b16 %v72
    %v273 = vunpack.c.l.b16 %v73
    %v274 = vunpack.c.l.b16 %v74
    %v275 = vunpack.c.l.b16 %v75
    %v276 = vunpack.c.l.b16 %v76
    %v277 = vunpack.c.l.b16 %v77
    %v278 = vunpack.c.l.b16 %v78
    %v279 = vunpack.c.l.b16 %v79
    %v280 = vunpack.c.l.b16 %v80
    %v281 = vunpack.c.l.b16 %v81
    %v282 = vunpack.c.l.b16 %v82
    %v283 = vunpack.c.l.b16 %v83
    %v284 = vunpack.c.l.b16 %v84
    %v285 = vunpack.c.l.b16 %v85
    %v286 = vunpack.c.l.b16 %v86
    %v287 = vunpack.c.l.b16 %v87
    %v288 = vunpack.c.l.b16 %v88
    %v289 = vunpack.c.l.b16 %v89
    %v290 = vunpack.c.l.b16 %v90
    %v291 = vunpack.c.l.b16 %v91
    %v292 = vunpack.c.l.b16 %v92
    %v293 = vunpack.c.l.b16 %v93
    %v294 = vunpack.c.l.b16 %v94
    %v295 = vunpack.c.l.b16 %v95
    %v296 = vunpack.c.l.b16 %v96
    %v297 = vunpack.c.l.b16 %v97
    %v298 = vunpack.c.l.b16 %v98
    %v299 = vunpack.c.l.b16 %v99
    %v300 = vunpack.c.l.b16 %v100
    %v301 = vunpack.c.l.b16 %v101
    %v302 = vunpack.c.l.b16 %v102
    %v303 = vunpack.c.l.b16 %v103
    %v304 = vunpack.c.l.b16 %v104
    %v305 = vunpack.c.l.b16 %v105
    %v306 = vunpack.c.l.b16 %v106
    %v307 = vunpack.c.l.b16 %v107
    %v308 = vunpack.c.l.b16 %v108
    %v309 = vunpack.c.l.b16 %v109
    %v310 = vunpack.c.l.b16 %v110
    %v311 = vunpack.c.l.b16 %v111
    %v312 = vunpack.c.l.b16 %v112
    %v313 = vunpack.c.l.b16 %v113
    %v314 = vunpack.c.l.b16 %v114
    %v315 = vunpack.c.l.b16 %v115
    %v316 = vunpack.c.l.b16 %v116
    %v317 = vunpack.c.l.b16 %v117
    %v318 = vunpack.c.l.b16 %v118
    %v319 = vunpack.c.l.b16 %v119
    %v320 = vunpack.c.l.b16 %v120
    %v321 = vunpack.c.l.b16 %v121
    %v322 = vunpack.c.l.b16 %v122
    %v323 = vunpack.c.l.b16 %v123
    %v324 = vunpack.c.l.b16 %v124
    %v325 = vunpack.c.l.b16 %v125
    %v326 = vunpack.c.l.b16 %v126
    %v327 = vunpack.c.l.b16 %v127
    %v328 = vunpack.c.l.b16 %v128
    %v329 = vunpack.c.l.b16 %v129
    %v330 = vunpack.c.l.b16 %v130
    %v331 = vunpack.c.l.b16 %v131
    %v332 = vunpack.c.l.b16 %v132
    %v333 = vunpack.c.l.b16 %v133
    %v334 = vunpack.c.l.b16 %v134
    %v335 = vunpack.c.l.b16 %v135
    %v336 = vunpack.c.l.b16 %v136
    %v337 = vunpack.c.l.b16 %v137
    %v338 = vunpack.c.l.b16 %v138
    %v339 = vunpack.c.l.b16 %v139
    %v340 = vunpack.c.l.b16 %v140
    %v341 = vunpack.c.l.b16 %v141
    %v342 = vunpack.c.l.b16 %v142
    %v343 = vunpack.c.l.b16 %v143
    %v344 = vunpack.c.l.b16 %v144
    %v345 = vunpack.c.l.b16 %v145
    %v346 = vunpack.c.l.b16 %v146
    %v347 = vunpack.c.l.b16 %v147
    %v348 = vunpack.c.l.b16 %v148
    %v349 = vunpack.c.l.b16 %v149
    %v350 = vunpack.c.l.b16 %v150
    %v351 = vunpack.c.l.b16 %v151
    %v352 = vunpack.c.l.b16 %v152
    %v353 = vunpack.c.l.b16 %v153
    %v354 = vunpack.c.l.b16 %v154
    %v355 = vunpack.c.l.b16 %v155
    %v356 = vunpack.c.l.b16 %v156
    %v357 = vunpack.c.l.b16 %v157
    %v358 = vunpack.c.l.b16 %v158
    %v359 = vunpack.c.l.b16 %v159
    %v360 = vunpack.c.l.b16 %v160
    %v361 = vunpack.c.l.b16 %v161
    %v362 = vunpack.c.l.b16 %v162
    %v363 = vunpack.c.l.b16 %v163
    %v364 = vpack.c.b16 %v267, %v266
    %v365 = vpack.c.b16 %v269, %v268
    %v366 = vpack.c.b16 %v271, %v270
    %v367 = vpack.c.b16 %v273, %v272
    %v368 = vpack.c.b16 %v275, %v274
    %v369 = vpack.c.b16 %v277, %v276
    %v370 = vpack.c.b16 %v279, %v278
    %v371 = vpack.c.b16 %v281, %v280
    %v372 = vpack.c.b16 %v283, %v282
    %v373 = vpack.c.b16 %v285, %v284
    %v374 = vpack.c.b16 %v287, %v286
    %v375 = vpack.c.b16 %v289, %v288
    %v376 = vpack.c.b16 %v291, %v290
    %v377 = vpack.c.b16 %v293, %v292
    %v378 = vpack.c.b16 %v295, %v294
    %v379 = vpack.c.b16 %v297, %v296
    %v380 = vpack.c.b16 %v299, %v298
    %v381 = vpack.c.b16 %v301, %v300
    %v382 = vpack.c.b16 %v303, %v302
    %v383 = vpack.c.b16 %v305, %v304
    %v384 = vpack.c.b16 %v307, %v306
    %v385 = vpack.c.b16 %v309, %v308
    %v386 = vpack.c.b16 %v311, %v310
    %v387 = vpack.c.b16 %v313, %v312
    %v388 = vpack.c.b16 %v315, %v314
    %v389 = vpack.c.b16 %v317, %v316
    %v390 = vpack.c.b16 %v319, %v318
    %v391 = vpack.c.b16 %v321, %v320
    %v392 = vpack.c.b16 %v323, %v322
    %v393 = vpack.c.b16 %v325, %v324
    %v394 = vpack.c.b16 %v327, %v326
    %v395 = vpack.c.b16 %v329, %v328
    %v396 = vpack.c.b16 %v331, %v330
    %v397 = vpack.c.b16 %v333, %v332
    %v398 = vpack.c.b16 %v335, %v334
    %v399 = vpack.c.b16 %v337, %v336
    %v400 = vpack.c.b16 %v339, %v338
    %v401 = vpack.c.b16 %v341, %v340
    %v402 = vpack.c.b16 %v343, %v342
    %v403 = vpack.c.b16 %v345, %v344
    %v404 = vpack.c.b16 %v347, %v346
    %v405 = vpack.c.b16 %v349, %v348
    %v406 = vpack.c.b16 %v351, %v350
    %v407 = vpack.c.b16 %v353, %v352
    %v408 = vpack.c.b16 %v355, %v354
    %v409 = vpack.c.b16 %v357, %v356
    %v410 = vpack.c.b16 %v359, %v358
    %v411 = vpack.c.b16 %v361, %v360
    %v412 = vpack.c.b16 %v363, %v362
    %vm462 = vcmask 130048
    %v464 = vsel %vm462, %v65, 0
    %466 = vmatpush.bf16.msra.mxu0 %v371
    %467 = vmatpush.bf16.msra.mxu0 %v370
    %468 = vmatpush.bf16.msra.mxu0 %v369
    %469 = vmatpush.bf16.msra.mxu0 %v368
    %470 = vmatpush.bf16.msra.mxu0 %v367
    %471 = vmatpush.bf16.msra.mxu0 %v366
    %472 = vmatpush.bf16.msra.mxu0 %v365
    %473 = vmatpush.bf16.msra.mxu0 %v364
    %474 = vmatmul.bf16.gmra.mxu0 %v59
    %v475 = vpop.f32.mrf.mxu0
    %v476 = vadd.f32 %v166, %v475
    %v477 = vpop.f32.mrf.mxu0
    %478 = vdwg.mxu0
    %479 = vmatpush.bf16.msra.mxu0 %v379
    %480 = vmatpush.bf16.msra.mxu0 %v378
    %481 = vmatpush.bf16.msra.mxu0 %v377
    %482 = vmatpush.bf16.msra.mxu0 %v376
    %483 = vmatpush.bf16.msra.mxu0 %v375
    %484 = vmatpush.bf16.msra.mxu0 %v374
    %485 = vmatpush.bf16.msra.mxu0 %v373
    %486 = vmatpush.bf16.msra.mxu0 %v372
    %487 = vmatmul.bf16.gmra.mxu0 %v60
    %v488 = vpop.f32.mrf.mxu0
    %v489 = vadd.f32 %v476, %v488
    %v490 = vpop.f32.mrf.mxu0
    %491 = vdwg.mxu0
    %492 = vmatpush.bf16.msra.mxu0 %v387
    %493 = vmatpush.bf16.msra.mxu0 %v386
    %494 = vmatpush.bf16.msra.mxu0 %v385
    %495 = vmatpush.bf16.msra.mxu0 %v384
    %496 = vmatpush.bf16.msra.mxu0 %v383
    %497 = vmatpush.bf16.msra.mxu0 %v382
    %498 = vmatpush.bf16.msra.mxu0 %v381
    %499 = vmatpush.bf16.msra.mxu0 %v380
    %500 = vmatmul.bf16.gmra.mxu0 %v61
    %v501 = vpop.f32.mrf.mxu0
    %v502 = vadd.f32 %v489, %v501
    %v503 = vpop.f32.mrf.mxu0
    %504 = vdwg.mxu0
    %505 = vmatpush.bf16.msra.mxu0 %v395
    %506 = vmatpush.bf16.msra.mxu0 %v394
    %507 = vmatpush.bf16.msra.mxu0 %v393
    %508 = vmatpush.bf16.msra.mxu0 %v392
    %509 = vmatpush.bf16.msra.mxu0 %v391
    %510 = vmatpush.bf16.msra.mxu0 %v390
    %511 = vmatpush.bf16.msra.mxu0 %v389
    %512 = vmatpush.bf16.msra.mxu0 %v388
    %513 = vmatmul.bf16.gmra.mxu0 %v62
    %v514 = vpop.f32.mrf.mxu0
    %v515 = vadd.f32 %v502, %v514
    %v516 = vpop.f32.mrf.mxu0
    %517 = vdwg.mxu0
    %518 = vmatpush.bf16.msra.mxu0 %v403
    %519 = vmatpush.bf16.msra.mxu0 %v402
    %520 = vmatpush.bf16.msra.mxu0 %v401
    %521 = vmatpush.bf16.msra.mxu0 %v400
    %522 = vmatpush.bf16.msra.mxu0 %v399
    %523 = vmatpush.bf16.msra.mxu0 %v398
    %524 = vmatpush.bf16.msra.mxu0 %v397
    %525 = vmatpush.bf16.msra.mxu0 %v396
    %526 = vmatmul.bf16.gmra.mxu0 %v63
    %v527 = vpop.f32.mrf.mxu0
    %v528 = vadd.f32 %v515, %v527
    %v529 = vpop.f32.mrf.mxu0
    %530 = vdwg.mxu0
    %531 = vmatpush.bf16.msra.mxu0 %v411
    %532 = vmatpush.bf16.msra.mxu0 %v410
    %533 = vmatpush.bf16.msra.mxu0 %v409
    %534 = vmatpush.bf16.msra.mxu0 %v408
    %535 = vmatpush.bf16.msra.mxu0 %v407
    %536 = vmatpush.bf16.msra.mxu0 %v406
    %537 = vmatpush.bf16.msra.mxu0 %v405
    %538 = vmatpush.bf16.msra.mxu0 %v404
    %539 = vmatmul.bf16.gmra.mxu0 %v64
    %v540 = vpop.f32.mrf.mxu0
    %v541 = vadd.f32 %v528, %v540
    %v542 = vpop.f32.mrf.mxu0
    %543 = vdwg.mxu0
    %544 = vmatpush.bf16.msra.mxu0 0
    %545 = vmatpush.bf16.msra.mxu0 0
    %546 = vmatpush.bf16.msra.mxu0 0
    %547 = vmatpush.bf16.msra.mxu0 0
    %548 = vmatpush.bf16.msra.mxu0 0
    %549 = vmatpush.bf16.msra.mxu0 0
    %550 = vmatpush.bf16.msra.mxu0 0
    %551 = vmatpush.bf16.msra.mxu0 %v412
    %552 = vmatmul.bf16.gmra.mxu0 %v464
    %v553 = vpop.f32.mrf.mxu0
    %v554 = vadd.f32 %v541, %v553
    %v555 = vpop.f32.mrf.mxu0
    %556 = vdwg.mxu0
    %v557 = vmax.f32 %v554, 0.0
    %v558 = vpack.c.bf16 %v557, %v557
    %v559 = vld [vmem:[%s3] sm:$0xf]
    %v560 = vld [vmem:[%s3 + $0x4] sm:$0xf]
    %v561 = vld [vmem:[%s3 + $0x8] sm:$0xf]
    %v562 = vld [vmem:[%s3 + $0xc] sm:$0xf]
    %v563 = vld [vmem:[%s3 + $0x10] sm:$0xf]
    %v564 = vld [vmem:[%s3 + $0x14] sm:$0xf]
    %v565 = vld [vmem:[%s3 + $0x18] sm:$0xf]
    %v566 = vld [vmem:[%s3 + $0x1c] sm:$0xf]
    %v567 = vld [vmem:[%s3 + $0x20] sm:$0xf]
    %v568 = vld [vmem:[%s3 + $0x24] sm:$0xf]
    %v569 = vld [vmem:[%s3 + $0x28] sm:$0xf]
    %v570 = vld [vmem:[%s3 + $0x2c] sm:$0xf]
    %v571 = vld [vmem:[%s3 + $0x30] sm:$0xf]
    %v572 = vld [vmem:[%s3 + $0x34] sm:$0xf]
    %v573 = vld [vmem:[%s3 + $0x38] sm:$0xf]
    %v574 = vld [vmem:[%s3 + $0x3c] sm:$0xf]
    %v575 = vld [vmem:[%s4] sm:$0x1]
    %v577 = vperm.slane %v575, 0
    %v595 = vunpack.c.l.b16 %v559
    %v596 = vunpack.c.l.b16 %v560
    %v597 = vunpack.c.l.b16 %v561
    %v598 = vunpack.c.l.b16 %v562
    %v599 = vunpack.c.l.b16 %v563
    %v600 = vunpack.c.l.b16 %v564
    %v601 = vunpack.c.l.b16 %v565
    %v602 = vunpack.c.l.b16 %v566
    %v603 = vunpack.c.l.b16 %v567
    %v604 = vunpack.c.l.b16 %v568
    %v605 = vunpack.c.l.b16 %v569
    %v606 = vunpack.c.l.b16 %v570
    %v607 = vunpack.c.l.b16 %v571
    %v608 = vunpack.c.l.b16 %v572
    %v609 = vunpack.c.l.b16 %v573
    %v610 = vunpack.c.l.b16 %v574
    %v611 = vpack.c.b16 %v596, %v595
    %v612 = vpack.c.b16 %v598, %v597
    %v613 = vpack.c.b16 %v600, %v599
    %v614 = vpack.c.b16 %v602, %v601
    %v615 = vpack.c.b16 %v604, %v603
    %v616 = vpack.c.b16 %v606, %v605
    %v617 = vpack.c.b16 %v608, %v607
    %v618 = vpack.c.b16 %v610, %v609
    %627 = vmatpush.bf16.msra.mxu0 %v618
    %628 = vmatpush.bf16.msra.mxu0 %v617
    %629 = vmatpush.bf16.msra.mxu0 %v616
    %630 = vmatpush.bf16.msra.mxu0 %v615
    %631 = vmatpush.bf16.msra.mxu0 %v614
    %632 = vmatpush.bf16.msra.mxu0 %v613
    %633 = vmatpush.bf16.msra.mxu0 %v612
    %634 = vmatpush.bf16.msra.mxu0 %v611
    %635 = vmatmul.bf16.gmra.mxu0 %v558
    %v636 = vpop.f32.mrf.mxu0
    %v637 = vadd.f32 %v577, %v636
    %v638 = vpop.f32.mrf.mxu0
    %639 = vdwg.mxu0
    %640 = vst [vmem:[#allocation5] sm:$0x3] %v637
    // Predicated region
    $region26: #{rubin_nn_forward.1} parent=1 // pred_check
      _
    $region27: #{rubin_nn_forward.1} parent=1 // pred_check_branch
      %642 = sbr.rel (0) target = $region29
    $region28: #{rubin_nn_forward.1} parent=1 // pred_region
      %644 = vsyncadd [#allocation4], 0
      %s646 = sshll.u32 [#allocation5], 4
      %s647 = int_to_ptr.vmem [resolvable:$true] %s646
      %s648 = sshll.u32 %s5, 4
      %s649 = int_to_ptr.hbm [resolvable:$true] %s648
      %651 = dma.vmem_to_hbm [thread:$0]  %s647, 32, %s649, [#allocation4]
    $region29: #{rubin_nn_forward.1} parent=1 // pred_fallthru
      _
    // Predicated region
    $region30: #{rubin_nn_forward.1} parent=1 // pred_check
      _
    $region31: #{rubin_nn_forward.1} parent=1 // pred_check_branch
      %653 = sbr.rel (0) target = $region33
    $region32: #{rubin_nn_forward.1} parent=1 // pred_region
      %655 = dma.done [#allocation4], 32
    $region33: #{rubin_nn_forward.1} parent=1 // pred_fallthru
      _
    %656 = vsyncpa [#allocation3], 1
    %657 = vsyncpa [#allocation4], 1

</llo_original>
